<compile_context>
chip_gen: v7x
topology: tpu7x:2x2x1
jax: 0.10.0
libtpu: 0.0.40
codegen_flags: <defaults>
</compile_context>

<pallas_src>
import jax
import jax.numpy as jnp
from jax.experimental import pallas as pl
from jax.experimental.pallas import tpu as pltpu

IN_DIM = 20
HIDDEN = 256
OUT_DIM = 10


def mlp_kernel(x_ref, w1_ref, b1_ref, w2_ref, b2_ref, o_ref):
    # In-kernel cast of x to bf16 (weights are already bf16); f32 accumulation.
    x_bf = x_ref[...].astype(jnp.bfloat16)
    h = jnp.dot(x_bf, w1_ref[...], preferred_element_type=jnp.float32)   # (tb, 256) f32
    h = jnp.maximum(h + b1_ref[...], 0.0)                                # bias + ReLU, f32
    y = jnp.dot(h.astype(jnp.bfloat16), w2_ref[...],
                preferred_element_type=jnp.float32)                      # (tb, 10) f32
    o_ref[...] = (y + b2_ref[...]).astype(o_ref.dtype)


def prepare_params(w1, b1, w2, b2):
    """One-time parameter prep (hoisted out of the per-forward path)."""
    return (w1.astype(jnp.bfloat16), b1.astype(jnp.float32),
            w2.astype(jnp.bfloat16), b2.astype(jnp.float32))


def _pick_batch_tile(B, block_b):
    """Batch tile: block_b for large batches; otherwise ~half the batch rounded
    up to the 8-sublane granule so the grid keeps >=2 steps (v7x megacore)."""
    if B >= 2 * block_b:
        return block_b
    if B > 8:
        half = -(-B // 2)
        return -(-half // 8) * 8
    return 8


def mlp_forward(x, w1_bf, b1_f, w2_bf, b2_f, *, block_b=2048):
    """x: (B, 20) f32.  Weights/biases must come from prepare_params()."""
    B = x.shape[0]
    tb = _pick_batch_tile(B, block_b)
    b_pad = -(-B // tb) * tb
    if b_pad != B:
        x = jnp.pad(x, ((0, b_pad - B), (0, 0)))

    grid = (b_pad // tb,)
    out = pl.pallas_call(
        mlp_kernel,
        out_shape=jax.ShapeDtypeStruct((b_pad, OUT_DIM), jnp.float32),
        grid_spec=pltpu.PrefetchScalarGridSpec(
            num_scalar_prefetch=0,
            grid=grid,
            in_specs=[
                pl.BlockSpec((tb, IN_DIM), lambda i: (i, 0)),        # x tile (f32)
                pl.BlockSpec((IN_DIM, HIDDEN), lambda i: (0, 0)),    # W1 resident (bf16)
                pl.BlockSpec((1, HIDDEN), lambda i: (0, 0)),         # b1 resident (f32)
                pl.BlockSpec((HIDDEN, OUT_DIM), lambda i: (0, 0)),   # W2 resident (bf16)
                pl.BlockSpec((1, OUT_DIM), lambda i: (0, 0)),        # b2 resident (f32)
            ],
            out_specs=pl.BlockSpec((tb, OUT_DIM), lambda i: (i, 0)), # narrow f32 out
        ),
        compiler_params=pltpu.CompilerParams(
            dimension_semantics=("parallel",),   # batch tiles split across TCs on v7x
        ),
    )(x, w1_bf, b1_f, w2_bf, b2_f)

    # Only slice when the batch actually needed padding (avoids an extra copy
    # pass in the common case where B is a multiple of the tile).
    return out if b_pad == B else out[:B]


def init_params(key):
    # Deterministic init mimicking nn.Linear's uniform(-1/sqrt(fan_in), 1/sqrt(fan_in)).
    k1, k2, k3, k4 = jax.random.split(key, 4)
    bound1 = 1.0 / jnp.sqrt(IN_DIM)
    bound2 = 1.0 / jnp.sqrt(HIDDEN)
    w1 = jax.random.uniform(k1, (IN_DIM, HIDDEN), jnp.float32, -bound1, bound1)
    b1 = jax.random.uniform(k2, (1, HIDDEN), jnp.float32, -bound1, bound1)
    w2 = jax.random.uniform(k3, (HIDDEN, OUT_DIM), jnp.float32, -bound2, bound2)
    b2 = jax.random.uniform(k4, (1, OUT_DIM), jnp.float32, -bound2, bound2)
    return w1, b1, w2, b2


if __name__ == "__main__":
    key = jax.random.PRNGKey(0)
    kx, kp = jax.random.split(key)
    # Matches `X = torch.rand(2, 20)` in the reference module.
    x = jax.random.uniform(kx, (2, IN_DIM), jnp.float32)
    w1, b1, w2, b2 = init_params(kp)

    # One-time weight prep (would be done at parameter-load time in practice).
    w1_bf, b1_f, w2_bf, b2_f = prepare_params(w1, b1, w2, b2)
    jax.block_until_ready((w1_bf, b1_f, w2_bf, b2_f))

    out = mlp_forward(x, w1_bf, b1_f, w2_bf, b2_f)
    jax.block_until_ready(out)
    assert out.shape == (2, OUT_DIM)
    assert out.dtype == jnp.float32

    # Reference 1: pure-f32 math (loose tolerance — kernel uses bf16 MXU inputs).
    ref_f32 = jnp.maximum(x @ w1 + b1, 0.0) @ w2 + b2
    assert jnp.allclose(out, ref_f32, atol=3e-2, rtol=3e-2)

    # Reference 2: bf16-input / f32-accumulate math (tight tolerance).
    x_bf = x.astype(jnp.bfloat16)
    h_ref = jnp.maximum(
        jnp.dot(x_bf, w1_bf, preferred_element_type=jnp.float32) + b1_f, 0.0)
    ref_bf = jnp.dot(h_ref.astype(jnp.bfloat16), w2_bf,
                     preferred_element_type=jnp.float32) + b2_f
    assert jnp.allclose(out, ref_bf, atol=2e-3, rtol=2e-3)

    # Sanity: a realistic batch exercising the multi-tile (parallel) grid path.
    xb = jax.random.uniform(jax.random.PRNGKey(1), (4096, IN_DIM), jnp.float32)
    out_b = mlp_forward(xb, w1_bf, b1_f, w2_bf, b2_f)
    jax.block_until_ready(out_b)
    assert out_b.shape == (4096, OUT_DIM)
    ref_b = jnp.maximum(xb @ w1 + b1, 0.0) @ w2 + b2
    assert jnp.allclose(out_b, ref_b, atol=3e-2, rtol=3e-2)

    print("KERNEL_OK")
</pallas_src>

<mosaic_0001>
module attributes {stable_mosaic.version = 11 : i64} {
  func.func @mlp_kernel(%arg0: i32, %arg1: memref<8x20xf32, #tpu.memory_space<vmem>>, %arg2: memref<20x256xbf16, #tpu.memory_space<vmem>>, %arg3: memref<1x256xf32, #tpu.memory_space<vmem>>, %arg4: memref<256x10xbf16, #tpu.memory_space<vmem>>, %arg5: memref<1x10xf32, #tpu.memory_space<vmem>>, %arg6: memref<8x10xf32, #tpu.memory_space<vmem>>) attributes {dimension_semantics = [#tpu.dimension_semantics<parallel>], iteration_bounds = array<i64: 1>, scalar_prefetch = 0 : i64, scratch_operands = 0 : i64, tpu.core_type = #tpu.core_type<tc>, window_params = [{transform_indices = @transform_0, window_bounds = array<i64: 8, 20>}, {pipeline_mode = #tpu.pipeline_mode<synchronous>, transform_indices = @transform_1, window_bounds = array<i64: 20, 256>}, {pipeline_mode = #tpu.pipeline_mode<synchronous>, transform_indices = @transform_2, window_bounds = array<i64: 1, 256>}, {pipeline_mode = #tpu.pipeline_mode<synchronous>, transform_indices = @transform_3, window_bounds = array<i64: 256, 10>}, {pipeline_mode = #tpu.pipeline_mode<synchronous>, transform_indices = @transform_4, window_bounds = array<i64: 1, 10>}, {transform_indices = @transform_5, window_bounds = array<i64: 8, 10>}]} {
    %c0 = arith.constant 0 : index
    %c0_0 = arith.constant 0 : index
    %0 = vector.load %arg1[%c0, %c0_0] : memref<8x20xf32, #tpu.memory_space<vmem>>, vector<8x20xf32>
    %1 = arith.truncf %0 : vector<8x20xf32> to vector<8x20xbf16>
    %c0_1 = arith.constant 0 : index
    %c0_2 = arith.constant 0 : index
    %2 = vector.load %arg2[%c0_1, %c0_2] : memref<20x256xbf16, #tpu.memory_space<vmem>>, vector<20x256xbf16>
    %cst = arith.constant dense<0.000000e+00> : vector<8x256xf32>
    %3 = tpu.matmul %1, %2, %cst {dimension_numbers = #tpu.dot_dimension_numbers<[1], [0], [0], [1], [0, 0, 1, 1], [], []>} : vector<8x20xbf16>, vector<20x256xbf16>, vector<8x256xf32> -> vector<8x256xf32>
    %c0_3 = arith.constant 0 : index
    %c0_4 = arith.constant 0 : index
    %4 = vector.load %arg3[%c0_3, %c0_4] : memref<1x256xf32, #tpu.memory_space<vmem>>, vector<1x256xf32>
    %5 = vector.broadcast %4 : vector<1x256xf32> to vector<8x256xf32>
    %6 = arith.addf %3, %5 : vector<8x256xf32>
    %cst_5 = arith.constant 0.000000e+00 : f32
    %7 = vector.broadcast %cst_5 : f32 to vector<8x256xf32>
    %8 = arith.maximumf %6, %7 : vector<8x256xf32>
    %9 = arith.truncf %8 : vector<8x256xf32> to vector<8x256xbf16>
    %c0_6 = arith.constant 0 : index
    %c0_7 = arith.constant 0 : index
    %10 = vector.load %arg4[%c0_6, %c0_7] : memref<256x10xbf16, #tpu.memory_space<vmem>>, vector<256x10xbf16>
    %cst_8 = arith.constant dense<0.000000e+00> : vector<8x10xf32>
    %11 = tpu.matmul %9, %10, %cst_8 {dimension_numbers = #tpu.dot_dimension_numbers<[1], [0], [0], [1], [0, 0, 1, 1], [], []>} : vector<8x256xbf16>, vector<256x10xbf16>, vector<8x10xf32> -> vector<8x10xf32>
    %c0_9 = arith.constant 0 : index
    %c0_10 = arith.constant 0 : index
    %12 = vector.load %arg5[%c0_9, %c0_10] : memref<1x10xf32, #tpu.memory_space<vmem>>, vector<1x10xf32>
    %13 = vector.broadcast %12 : vector<1x10xf32> to vector<8x10xf32>
    %14 = arith.addf %11, %13 : vector<8x10xf32>
    %c0_11 = arith.constant 0 : index
    %c0_12 = arith.constant 0 : index
    %15 = vector.load %arg6[%c0_11, %c0_12] : memref<8x10xf32, #tpu.memory_space<vmem>>, vector<8x10xf32>
    tpu.vector_store %arg6[%c0_11, %c0_12], %14 {strides = array<i32>} : memref<8x10xf32, #tpu.memory_space<vmem>>, vector<8x10xf32>,
    return
  }
  func.func @transform_0(%arg0: i32) -> (i32, i32) {
    %c0_i32 = arith.constant 0 : i32
    %c0_i32_0 = arith.constant 0 : i32
    return %arg0, %c0_i32 : i32, i32
  }
  func.func @transform_1(%arg0: i32) -> (i32, i32) {
    %c0_i32 = arith.constant 0 : i32
    %c0_i32_0 = arith.constant 0 : i32
    %c0_i32_1 = arith.constant 0 : i32
    return %c0_i32, %c0_i32_0 : i32, i32
  }
  func.func @transform_2(%arg0: i32) -> (i32, i32) {
    %c0_i32 = arith.constant 0 : i32
    %c0_i32_0 = arith.constant 0 : i32
    %c0_i32_1 = arith.constant 0 : i32
    return %c0_i32, %c0_i32_0 : i32, i32
  }
  func.func @transform_3(%arg0: i32) -> (i32, i32) {
    %c0_i32 = arith.constant 0 : i32
    %c0_i32_0 = arith.constant 0 : i32
    %c0_i32_1 = arith.constant 0 : i32
    return %c0_i32, %c0_i32_0 : i32, i32
  }
  func.func @transform_4(%arg0: i32) -> (i32, i32) {
    %c0_i32 = arith.constant 0 : i32
    %c0_i32_0 = arith.constant 0 : i32
    %c0_i32_1 = arith.constant 0 : i32
    return %c0_i32, %c0_i32_0 : i32, i32
  }
  func.func @transform_5(%arg0: i32) -> (i32, i32) {
    %c0_i32 = arith.constant 0 : i32
    %c0_i32_0 = arith.constant 0 : i32
    return %arg0, %c0_i32 : i32, i32
  }
}

</mosaic_0001>

<llo_original>
// kernel: tpu_custom_call.1
$region0: #{tpu_custom_call.1}
  #allocation0 [shape = 'u32[]', space=smem, size = 0x4, offset = 0x4, fixed_abs, tag = 'smem constant byte address 0x4 - core index']
  #allocation1 [shape = 'u32[144,128]{1,0:T(1,128)}', space=vmem, size = 0x12000, scoped, tag = 'internal scratch']
  %s0 = inlined_call_operand.vmem [shape: f32[8,20], index: 0, kind: input, shape index: {}]
  %s1 = inlined_call_operand.vmem [shape: bf16[20,256], index: 1, kind: input, shape index: {}]
  %s2 = inlined_call_operand.vmem [shape: f32[1,256], index: 2, kind: input, shape index: {}]
  %s3 = inlined_call_operand.vmem [shape: bf16[256,10], index: 3, kind: input, shape index: {}]
  %s4 = inlined_call_operand.vmem [shape: f32[1,10], index: 4, kind: input, shape index: {}]
  %s5 = inlined_call_operand.hbm [shape: f32[8,10], index: 5, kind: output, shape index: {}]
  %s6 = sld [smem:[#allocation0]]
  $region30: #{tpu_custom_call.1} parent=0
    _
  %s8 = ssub.s32 1, %s6
  %s9 = scalar_select 0, %s8, %s6
  $region1: #{tpu_custom_call.1} parent=0
    #allocation2 [shape = 'u8[4096]{0}', space=vmem, size = 0x1000, scoped, tag = 'output window, operand 0, single buffered']
    #allocation3 [shape = 's32[1]{0}', space=sflag, size = 0x4, scoped, tag = 'scoped memory for tpu_custom_call.1']
    %10 = vsyncpa [#allocation3], 0
    // Predicated region
    $region2: #{tpu_custom_call.1} parent=1 // pred_check
      _
    $region3: #{tpu_custom_call.1} parent=1 // pred_check_branch
      %12 = sbr.rel (0) target = $region5
    $region4: #{tpu_custom_call.1} parent=1 // pred_region
      _
    $region5: #{tpu_custom_call.1} parent=1 // pred_fallthru
      _
    // Predicated region
    $region6: #{tpu_custom_call.1} parent=1 // pred_check
      _
    $region7: #{tpu_custom_call.1} parent=1 // pred_check_branch
      %14 = sbr.rel (0) target = $region9
    $region8: #{tpu_custom_call.1} parent=1 // pred_region
      _
    $region9: #{tpu_custom_call.1} parent=1 // pred_fallthru
      _
    // Predicated region
    $region10: #{tpu_custom_call.1} parent=1 // pred_check
      _
    $region11: #{tpu_custom_call.1} parent=1 // pred_check_branch
      %16 = sbr.rel (0) target = $region13
    $region12: #{tpu_custom_call.1} parent=1 // pred_region
      _
    $region13: #{tpu_custom_call.1} parent=1 // pred_fallthru
      _
    // Predicated region
    $region14: #{tpu_custom_call.1} parent=1 // pred_check
      _
    $region15: #{tpu_custom_call.1} parent=1 // pred_check_branch
      %18 = sbr.rel (0) target = $region17
    $region16: #{tpu_custom_call.1} parent=1 // pred_region
      _
    $region17: #{tpu_custom_call.1} parent=1 // pred_fallthru
      _
    // Predicated region
    $region18: #{tpu_custom_call.1} parent=1 // pred_check
      _
    $region19: #{tpu_custom_call.1} parent=1 // pred_check_branch
      %20 = sbr.rel (0) target = $region21
    $region20: #{tpu_custom_call.1} parent=1 // pred_region
      _
    $region21: #{tpu_custom_call.1} parent=1 // pred_fallthru
      _
    %v22 = vld [vmem:[%s0] sm:$0xff]
    %v23 = vpack.c.bf16 %v22, %v22
    %v24 = vld [vmem:[%s1] sm:$0xff]
    %v25 = vld [vmem:[%s1 + $0x8] sm:$0xff]
    %v26 = vld [vmem:[%s1 + $0x10] sm:$0x33]
    %v27 = vld [vmem:[%s2] sm:$0x3]
    %v29 = vlaneseq
    %v30 = vshrl.u32 %v29, 7
    %v31 = vsub.s32 0, %v30
    %v32 = vrot.slane %v27, %v31
    %v33 = vlaneseq
    %v34 = vshrl.u32 %v33, 7
    %v35 = vsub.s32 1, %v34
    %v36 = vrot.slane %v27, %v35
    %v42 = vunpack.c.l.b16 %v24
    %v43 = vunpack.c.h.b16 %v24
    %v44 = vunpack.c.l.b16 %v25
    %v45 = vunpack.c.h.b16 %v25
    %v46 = vunpack.c.l.b16 %v26
    %v47 = vunpack.c.h.b16 %v26
    %v48 = vpack.c.b16 %v44, %v42
    %v49 = vpack.c.b16 %v45, %v43
    %v50 = vpack.c.b16 %v46, %v46
    %v51 = vpack.c.b16 %v47, %v47
    %vm54 = vcmask 162816
    %v56 = vsel %vm54, %v23, 0
    %vm58 = vcmask 1041408
    %v60 = vsel %vm58, %v50, 0
    %v63 = vsel %vm58, %v51, 0
    %65 = vmatprep.subr.bf16.mxu0 %v49
    %66 = vmatpush1.bf16.msra.mxu0 %v48
    %67 = vmatprep.subr.bf16.mxu0 %v63
    %68 = vmatpush1.bf16.msra.mxu0 %v60
    %69 = vmatprep.subr.bf16.mxu0 0
    %70 = vmatpush1.bf16.msra.mxu0 0
    %71 = vmatprep.subr.bf16.mxu0 0
    %72 = vmatpush1.bf16.msra.mxu0 0
    %73 = vmatprep.subr.bf16.mxu0 0
    %74 = vmatpush1.bf16.msra.mxu0 0
    %75 = vmatprep.subr.bf16.mxu0 0
    %76 = vmatpush1.bf16.msra.mxu0 0
    %77 = vmatprep.subr.bf16.mxu0 0
    %78 = vmatpush1.bf16.msra.mxu0 0
    %79 = vmatprep.subr.bf16.mxu0 0
    %80 = vmatpush1.bf16.msra.mxu0 0
    %81 = vmatprep.subr.bf16.mxu0 0
    %82 = vmatpush1.bf16.msra.mxu0 0
    %83 = vmatprep.subr.bf16.mxu0 0
    %84 = vmatpush1.bf16.msra.mxu0 0
    %85 = vmatprep.subr.bf16.mxu0 0
    %86 = vmatpush1.bf16.msra.mxu0 0
    %87 = vmatprep.subr.bf16.mxu0 0
    %88 = vmatpush1.bf16.msra.mxu0 0
    %89 = vmatprep.subr.bf16.mxu0 0
    %90 = vmatpush1.bf16.msra.mxu0 0
    %91 = vmatprep.subr.bf16.mxu0 0
    %92 = vmatpush1.bf16.msra.mxu0 0
    %93 = vmatprep.subr.bf16.mxu0 0
    %94 = vmatpush1.bf16.msra.mxu0 0
    %95 = vmatprep.subr.bf16.mxu0 0
    %96 = vmatpush1.bf16.msra.mxu0 0
    %97 = vmatprep.mubr.bf16.mxu0 0
    %98 = vmatmul.mubr.bf16.gmra.mrb[0].mxu0 %v56
    %v99 = vpop.f32.mrb[0].mxu0
    %v100 = vadd.f32 %v32, %v99
    %v101 = vpop.f32.mrb[0].mxu0
    %v102 = vadd.f32 %v36, %v101
    %v103 = vpop.f32.mrb[0].mxu0
    %v104 = vpop.f32.mrb[0].mxu0
    %105 = vdwg.mxu0
    %v106 = vmax.f32 %v100, 0.0
    %v107 = vmax.f32 %v102, 0.0
    %v108 = vpack.c.bf16 %v106, %v106
    %v109 = vpack.c.bf16 %v107, %v107
    %v110 = vld [vmem:[%s3] sm:$0xf]
    %v111 = vld [vmem:[%s3 + $0x4] sm:$0xf]
    %v112 = vld [vmem:[%s3 + $0x8] sm:$0xf]
    %v113 = vld [vmem:[%s3 + $0xc] sm:$0xf]
    %v114 = vld [vmem:[%s3 + $0x10] sm:$0xf]
    %v115 = vld [vmem:[%s3 + $0x14] sm:$0xf]
    %v116 = vld [vmem:[%s3 + $0x18] sm:$0xf]
    %v117 = vld [vmem:[%s3 + $0x1c] sm:$0xf]
    %v118 = vld [vmem:[%s3 + $0x20] sm:$0xf]
    %v119 = vld [vmem:[%s3 + $0x24] sm:$0xf]
    %v120 = vld [vmem:[%s3 + $0x28] sm:$0xf]
    %v121 = vld [vmem:[%s3 + $0x2c] sm:$0xf]
    %v122 = vld [vmem:[%s3 + $0x30] sm:$0xf]
    %v123 = vld [vmem:[%s3 + $0x34] sm:$0xf]
    %v124 = vld [vmem:[%s3 + $0x38] sm:$0xf]
    %v125 = vld [vmem:[%s3 + $0x3c] sm:$0xf]
    %v126 = vld [vmem:[%s3 + $0x40] sm:$0xf]
    %v127 = vld [vmem:[%s3 + $0x44] sm:$0xf]
    %v128 = vld [vmem:[%s3 + $0x48] sm:$0xf]
    %v129 = vld [vmem:[%s3 + $0x4c] sm:$0xf]
    %v130 = vld [vmem:[%s3 + $0x50] sm:$0xf]
    %v131 = vld [vmem:[%s3 + $0x54] sm:$0xf]
    %v132 = vld [vmem:[%s3 + $0x58] sm:$0xf]
    %v133 = vld [vmem:[%s3 + $0x5c] sm:$0xf]
    %v134 = vld [vmem:[%s3 + $0x60] sm:$0xf]
    %v135 = vld [vmem:[%s3 + $0x64] sm:$0xf]
    %v136 = vld [vmem:[%s3 + $0x68] sm:$0xf]
    %v137 = vld [vmem:[%s3 + $0x6c] sm:$0xf]
    %v138 = vld [vmem:[%s3 + $0x70] sm:$0xf]
    %v139 = vld [vmem:[%s3 + $0x74] sm:$0xf]
    %v140 = vld [vmem:[%s3 + $0x78] sm:$0xf]
    %v141 = vld [vmem:[%s3 + $0x7c] sm:$0xf]
    %v142 = vld [vmem:[%s4] sm:$0x1]
    %v144 = vlaneseq
    %v145 = vshrl.u32 %v144, 7
    %v146 = vsub.s32 0, %v145
    %v147 = vrot.slane %v142, %v146
    %v181 = vunpack.c.l.b16 %v110
    %v182 = vunpack.c.l.b16 %v111
    %v183 = vunpack.c.l.b16 %v112
    %v184 = vunpack.c.l.b16 %v113
    %v185 = vunpack.c.l.b16 %v114
    %v186 = vunpack.c.l.b16 %v115
    %v187 = vunpack.c.l.b16 %v116
    %v188 = vunpack.c.l.b16 %v117
    %v189 = vunpack.c.l.b16 %v118
    %v190 = vunpack.c.l.b16 %v119
    %v191 = vunpack.c.l.b16 %v120
    %v192 = vunpack.c.l.b16 %v121
    %v193 = vunpack.c.l.b16 %v122
    %v194 = vunpack.c.l.b16 %v123
    %v195 = vunpack.c.l.b16 %v124
    %v196 = vunpack.c.l.b16 %v125
    %v197 = vunpack.c.l.b16 %v126
    %v198 = vunpack.c.l.b16 %v127
    %v199 = vunpack.c.l.b16 %v128
    %v200 = vunpack.c.l.b16 %v129
    %v201 = vunpack.c.l.b16 %v130
    %v202 = vunpack.c.l.b16 %v131
    %v203 = vunpack.c.l.b16 %v132
    %v204 = vunpack.c.l.b16 %v133
    %v205 = vunpack.c.l.b16 %v134
    %v206 = vunpack.c.l.b16 %v135
    %v207 = vunpack.c.l.b16 %v136
    %v208 = vunpack.c.l.b16 %v137
    %v209 = vunpack.c.l.b16 %v138
    %v210 = vunpack.c.l.b16 %v139
    %v211 = vunpack.c.l.b16 %v140
    %v212 = vunpack.c.l.b16 %v141
    %v213 = vpack.c.b16 %v182, %v181
    %v214 = vpack.c.b16 %v184, %v183
    %v215 = vpack.c.b16 %v186, %v185
    %v216 = vpack.c.b16 %v188, %v187
    %v217 = vpack.c.b16 %v190, %v189
    %v218 = vpack.c.b16 %v192, %v191
    %v219 = vpack.c.b16 %v194, %v193
    %v220 = vpack.c.b16 %v196, %v195
    %v221 = vpack.c.b16 %v198, %v197
    %v222 = vpack.c.b16 %v200, %v199
    %v223 = vpack.c.b16 %v202, %v201
    %v224 = vpack.c.b16 %v204, %v203
    %v225 = vpack.c.b16 %v206, %v205
    %v226 = vpack.c.b16 %v208, %v207
    %v227 = vpack.c.b16 %v210, %v209
    %v228 = vpack.c.b16 %v212, %v211
    %245 = vmatprep.subr.bf16.mxu0 0
    %246 = vmatpush1.bf16.msra.mxu0 %v213
    %247 = vmatprep.subr.bf16.mxu0 0
    %248 = vmatpush1.bf16.msra.mxu0 %v214
    %249 = vmatprep.subr.bf16.mxu0 0
    %250 = vmatpush1.bf16.msra.mxu0 %v215
    %251 = vmatprep.subr.bf16.mxu0 0
    %252 = vmatpush1.bf16.msra.mxu0 %v216
    %253 = vmatprep.subr.bf16.mxu0 0
    %254 = vmatpush1.bf16.msra.mxu0 %v217
    %255 = vmatprep.subr.bf16.mxu0 0
    %256 = vmatpush1.bf16.msra.mxu0 %v218
    %257 = vmatprep.subr.bf16.mxu0 0
    %258 = vmatpush1.bf16.msra.mxu0 %v219
    %259 = vmatprep.subr.bf16.mxu0 0
    %260 = vmatpush1.bf16.msra.mxu0 %v220
    %261 = vmatprep.subr.bf16.mxu0 0
    %262 = vmatpush1.bf16.msra.mxu0 %v221
    %263 = vmatprep.subr.bf16.mxu0 0
    %264 = vmatpush1.bf16.msra.mxu0 %v222
    %265 = vmatprep.subr.bf16.mxu0 0
    %266 = vmatpush1.bf16.msra.mxu0 %v223
    %267 = vmatprep.subr.bf16.mxu0 0
    %268 = vmatpush1.bf16.msra.mxu0 %v224
    %269 = vmatprep.subr.bf16.mxu0 0
    %270 = vmatpush1.bf16.msra.mxu0 %v225
    %271 = vmatprep.subr.bf16.mxu0 0
    %272 = vmatpush1.bf16.msra.mxu0 %v226
    %273 = vmatprep.subr.bf16.mxu0 0
    %274 = vmatpush1.bf16.msra.mxu0 %v227
    %275 = vmatprep.subr.bf16.mxu0 0
    %276 = vmatpush1.bf16.msra.mxu0 %v228
    %277 = vmatprep.mubr.bf16.mxu0 %v109
    %278 = vmatmul.mubr.bf16.gmra.mrb[0].mxu0 %v108
    %v279 = vpop.f32.mrb[0].mxu0
    %v280 = vadd.f32 %v147, %v279
    %v281 = vpop.f32.mrb[0].mxu0
    %v282 = vpop.f32.mrb[0].mxu0
    %v283 = vpop.f32.mrb[0].mxu0
    %284 = vdwg.mxu0
    %vm285 = vcmask 80896
    %286 = vst.msk [vmem:[#allocation2] sm:$0xff] %vm285, %v280
    // Predicated region
    $region22: #{tpu_custom_call.1} parent=1 // pred_check
      _
    $region23: #{tpu_custom_call.1} parent=1 // pred_check_branch
      %288 = sbr.rel (0) target = $region25
    $region24: #{tpu_custom_call.1} parent=1 // pred_region
      %s290 = ssub.s32 128, 128
      %291 = vsyncadd [#allocation3], %s290
      %s293 = sshll.u32 [#allocation2], 4
      %s294 = int_to_ptr.vmem [resolvable:$true] %s293
      %296 = dma.vmem_to_hbm [thread:$0]  %s294, 128, %s5, [#allocation3]
    $region25: #{tpu_custom_call.1} parent=1 // pred_fallthru
      _
    // Predicated region
    $region26: #{tpu_custom_call.1} parent=1 // pred_check
      _
    $region27: #{tpu_custom_call.1} parent=1 // pred_check_branch
      %298 = sbr.rel (0) target = $region29
    $region28: #{tpu_custom_call.1} parent=1 // pred_region
      %299 = dma.done [#allocation3], 128
    $region29: #{tpu_custom_call.1} parent=1 // pred_fallthru
      _
    %300 = vsyncpa [#allocation3], 1

</llo_original>
